<compile_context>
chip_gen: v6e
topology: v6e:2x2x1
jax: 0.10.0
libtpu: 0.0.40
codegen_flags: <defaults>
</compile_context>

<pallas_src>
import functools
import math

import jax
import jax.numpy as jnp
from jax.experimental import pallas as pl
from jax.experimental.pallas import tpu as pltpu


def _round_up(x, m):
    return (x + m - 1) // m * m


def _cdiv(a, b):
    return -(-a // b)


def _num_tensorcores():
    """Best-effort TensorCore count of device 0 (v7x has 2, v5e/v6e have 1)."""
    try:
        n = getattr(jax.devices()[0], "num_cores", 1) or 1
        return max(1, int(n))
    except Exception:
        return 1


def _vmem_budget_bytes():
    """~3/4 of physical VMEM: ~48 MiB on v7x (64 MiB), ~96 MiB on v5e/v6e (128 MiB)."""
    try:
        cap = int(pltpu.get_tpu_info().vmem_capacity_bytes)
    except Exception:
        cap = 64 * 1024 * 1024  # conservative (v7x) if the query is unavailable
    return (cap * 3) // 4


# ---------------------------------------------------------------------------
# Kernels
# ---------------------------------------------------------------------------
def _mhd_resident_kernel(x_ref, w_ref, o_ref, *, compute_dtype):
    # x_ref: (tm, D) tile of the flattened input (original dtype)
    # w_ref: (D, D) full weight, resident in VMEM across the M grid
    # o_ref: (tm, D) output tile
    xv = x_ref[...]
    wv = w_ref[...]
    if compute_dtype is not None:  # optional in-kernel cast (hides under DMA/MXU)
        xv = xv.astype(compute_dtype)
        wv = wv.astype(compute_dtype)
    o_ref[...] = jnp.dot(xv, wv, preferred_element_type=jnp.float32).astype(o_ref.dtype)


def _mhd_tiled_kernel(x_ref, w_ref, o_ref, acc_ref, *, compute_dtype):
    # Fallback for weights too large to keep resident: grid = (M, N, K),
    # f32 accumulator initialized / finalized with pl.when on the K axis.
    @pl.when(pl.program_id(2) == 0)
    def _():
        acc_ref[...] = jnp.zeros_like(acc_ref)

    xv = x_ref[...]
    wv = w_ref[...]
    if compute_dtype is not None:
        xv = xv.astype(compute_dtype)
        wv = wv.astype(compute_dtype)
    acc_ref[...] += jnp.dot(xv, wv, preferred_element_type=jnp.float32)

    @pl.when(pl.program_id(2) == pl.num_programs(2) - 1)
    def _():
        o_ref[...] = acc_ref[...].astype(o_ref.dtype)


# ---------------------------------------------------------------------------
# Wrapper
# ---------------------------------------------------------------------------
def multi_head_dense(x, weight, *, compute_dtype=None, out_dtype=None,
                     force_tiled=False):
    """x: (B, WH, D), weight: (D, D) -> (B, WH, D); same semantics as torch.bmm.

    compute_dtype=None keeps the input dtype on the MXU (no lossy downcast).
    out_dtype=None writes the input dtype.
    """
    b, wh, d = x.shape
    assert weight.shape == (d, d)
    out_dtype = x.dtype if out_dtype is None else jnp.dtype(out_dtype)
    m = b * wh
    x2 = x.reshape(m, d)

    eff_compute = jnp.dtype(x.dtype) if compute_dtype is None else jnp.dtype(compute_dtype)
    cast = None if eff_compute == jnp.dtype(x.dtype) else eff_compute

    in_sz = jnp.dtype(x.dtype).itemsize
    out_sz = jnp.dtype(out_dtype).itemsize
    num_cores = _num_tensorcores()
    vmem_budget = _vmem_budget_bytes()
    slack = 2 << 20

    # --- M tile: big enough to amortize per-step overhead, TC-balanced.
    bytes_per_row = max(1, d * (in_sz + out_sz))
    tm = max(8, min(4096, (4 << 20) // bytes_per_row))       # ~4 MiB per grid step
    tm = min(tm, max(8, _cdiv(m, num_cores)))                 # >= num_cores steps if possible
    tm = _round_up(tm, 8)
    tm = min(tm, _round_up(m, 8))

    # --- resident-weight feasibility (weight lives in VMEM for the whole grid).
    w_bytes = d * d * in_sz                                    # single-buffered weight
    def resident_need(tm_):
        return 2 * tm_ * d * in_sz + 2 * tm_ * d * out_sz + w_bytes + slack

    use_resident = (not force_tiled) and resident_need(8) <= vmem_budget
    if use_resident:
        while tm > 8 and resident_need(tm) > vmem_budget:
            tm = max(8, _round_up(tm // 2, 8))

    if use_resident:
        grid_m = _cdiv(m, tm)
        # Keep all TensorCores busy / balanced (v7x) when there is enough work.
        if num_cores > 1 and grid_m > 1 and grid_m % num_cores:
            grid_m = _round_up(grid_m, num_cores)
            tm = _round_up(_cdiv(m, grid_m), 8)
            grid_m = _cdiv(m, tm)

        # Weight is fetched once (constant index_map): single-buffer it if the
        # installed Pallas supports pipeline_mode; otherwise fall back cleanly.
        try:
            w_spec = pl.BlockSpec((d, d), lambda i: (0, 0),
                                  pipeline_mode=pl.Buffered(1))
        except TypeError:
            w_spec = pl.BlockSpec((d, d), lambda i: (0, 0))

        cost = pl.CostEstimate(
            flops=2 * m * d * d,
            transcendentals=0,
            bytes_accessed=m * d * (in_sz + out_sz) + d * d * in_sz,
        )
        vmem_limit = int(min(vmem_budget, max(resident_need(tm) + (4 << 20), 32 << 20)))

        out = pl.pallas_call(
            functools.partial(_mhd_resident_kernel, compute_dtype=cast),
            out_shape=jax.ShapeDtypeStruct((m, d), out_dtype),
            grid_spec=pltpu.PrefetchScalarGridSpec(
                num_scalar_prefetch=0,
                grid=(grid_m,),
                in_specs=[
                    pl.BlockSpec((tm, d), lambda i: (i, 0)),
                    w_spec,
                ],
                out_specs=pl.BlockSpec((tm, d), lambda i: (i, 0)),
            ),
            compiler_params=pltpu.CompilerParams(
                dimension_semantics=("parallel",),
                vmem_limit_bytes=vmem_limit,
            ),
            cost_estimate=cost,
        )(x2, weight)
        return out.reshape(b, wh, d)

    # --- K/N-tiled fallback for very large D (resident weight exceeds VMEM budget).
    tn = min(256, _round_up(d, 128))
    tk = min(512, _round_up(d, 128))
    tm_t = min(512, _round_up(m, 8))
    d_pad_k = _round_up(d, tk)          # zero-pad K so reduction never sees garbage
    d_pad_n = _round_up(d, tn)
    xk = x2 if d_pad_k == d else jnp.pad(x2, ((0, 0), (0, d_pad_k - d)))
    wp = weight if (d_pad_k == d and d_pad_n == d) else jnp.pad(
        weight, ((0, d_pad_k - d), (0, d_pad_n - d)))
    grid = (_cdiv(m, tm_t), d_pad_n // tn, d_pad_k // tk)

    cost = pl.CostEstimate(
        flops=2 * m * d_pad_k * d_pad_n,
        transcendentals=0,
        bytes_accessed=(m * d_pad_k * in_sz * (d_pad_n // tn)
                        + d_pad_k * d_pad_n * in_sz * grid[0]
                        + m * d_pad_n * out_sz),
    )

    out = pl.pallas_call(
        functools.partial(_mhd_tiled_kernel, compute_dtype=cast),
        out_shape=jax.ShapeDtypeStruct((m, d_pad_n), out_dtype),
        grid_spec=pltpu.PrefetchScalarGridSpec(
            num_scalar_prefetch=0,
            grid=grid,
            in_specs=[
                pl.BlockSpec((tm_t, tk), lambda i, j, k: (i, k)),
                pl.BlockSpec((tk, tn), lambda i, j, k: (k, j)),
            ],
            out_specs=pl.BlockSpec((tm_t, tn), lambda i, j, k: (i, j)),
            scratch_shapes=[pltpu.VMEM((tm_t, tn), jnp.float32)],
        ),
        compiler_params=pltpu.CompilerParams(
            dimension_semantics=("parallel", "parallel", "arbitrary"),
            vmem_limit_bytes=int(vmem_budget),
        ),
        cost_estimate=cost,
    )(xk, wp)
    if d_pad_n != d:
        out = out[:, :d]
    return out.reshape(b, wh, d)


def init_weight(key, d):
    # nn.init.kaiming_uniform_(weight, a=sqrt(5)) on a (d, d) tensor:
    # fan_in = d, gain = sqrt(2 / (1 + 5)) = sqrt(1/3),
    # bound = gain * sqrt(3 / fan_in) = 1 / sqrt(d)
    bound = 1.0 / math.sqrt(d)
    return jax.random.uniform(key, (d, d), jnp.float32, -bound, bound)


if __name__ == "__main__":
    key = jax.random.PRNGKey(0)
    kx, kw, kx2, kw2 = jax.random.split(key, 4)

    # --- main example: small shapes matching the module (B, WH, D) ---
    B, WH, D = 2, 16, 32
    x = jax.random.normal(kx, (B, WH, D), jnp.float32)
    w = init_weight(kw, D)

    out = jax.block_until_ready(multi_head_dense(x, w))
    ref = jnp.einsum("bwd,de->bwe", x, w)
    assert out.shape == (B, WH, D)
    # f32 data end-to-end (no bf16 downcast); tolerance only covers MXU default
    # contract-precision differences between the kernel and the XLA reference.
    assert jnp.allclose(out, ref, atol=2e-2, rtol=2e-2), float(
        jnp.max(jnp.abs(out - ref)))

    # --- also exercise the K/N-tiled fallback path (large-D regime) ---
    B2, WH2, D2 = 2, 24, 640
    x2 = jax.random.normal(kx2, (B2, WH2, D2), jnp.float32)
    w2 = init_weight(kw2, D2)
    out2 = jax.block_until_ready(multi_head_dense(x2, w2, force_tiled=True))
    ref2 = jnp.einsum("bwd,de->bwe", x2, w2)
    assert out2.shape == (B2, WH2, D2)
    assert jnp.allclose(out2, ref2, atol=3e-2, rtol=3e-2), float(
        jnp.max(jnp.abs(out2 - ref2)))

    print("KERNEL_OK")
</pallas_src>

<mosaic_0001>
module attributes {stable_mosaic.version = 11 : i64} {
  func.func @_mhd_resident_kernel(%arg0: i32, %arg1: memref<32x32xf32, #tpu.memory_space<vmem>>, %arg2: memref<32x32xf32, #tpu.memory_space<vmem>>, %arg3: memref<32x32xf32, #tpu.memory_space<vmem>>) attributes {dimension_semantics = [#tpu.dimension_semantics<parallel>], iteration_bounds = array<i64: 1>, scalar_prefetch = 0 : i64, scratch_operands = 0 : i64, tpu.core_type = #tpu.core_type<tc>, window_params = [{transform_indices = @transform_0, window_bounds = array<i64: 32, 32>}, {pipeline_mode = #tpu.pipeline_mode<synchronous>, transform_indices = @transform_1, window_bounds = array<i64: 32, 32>}, {transform_indices = @transform_2, window_bounds = array<i64: 32, 32>}]} {
    %c0 = arith.constant 0 : index
    %c0_0 = arith.constant 0 : index
    %0 = vector.load %arg1[%c0, %c0_0] : memref<32x32xf32, #tpu.memory_space<vmem>>, vector<32x32xf32>
    %c0_1 = arith.constant 0 : index
    %c0_2 = arith.constant 0 : index
    %1 = vector.load %arg2[%c0_1, %c0_2] : memref<32x32xf32, #tpu.memory_space<vmem>>, vector<32x32xf32>
    %cst = arith.constant dense<0.000000e+00> : vector<32x32xf32>
    %2 = tpu.matmul %0, %1, %cst {dimension_numbers = #tpu.dot_dimension_numbers<[1], [0], [0], [1], [0, 0, 1, 1], [], []>} : vector<32x32xf32>, vector<32x32xf32>, vector<32x32xf32> -> vector<32x32xf32>
    %c0_3 = arith.constant 0 : index
    %c0_4 = arith.constant 0 : index
    %3 = vector.load %arg3[%c0_3, %c0_4] : memref<32x32xf32, #tpu.memory_space<vmem>>, vector<32x32xf32>
    tpu.vector_store %arg3[%c0_3, %c0_4], %2 {strides = array<i32>} : memref<32x32xf32, #tpu.memory_space<vmem>>, vector<32x32xf32>,
    return
  }
  func.func @transform_0(%arg0: i32) -> (i32, i32) {
    %c0_i32 = arith.constant 0 : i32
    %c0_i32_0 = arith.constant 0 : i32
    return %arg0, %c0_i32 : i32, i32
  }
  func.func @transform_1(%arg0: i32) -> (i32, i32) {
    %c0_i32 = arith.constant 0 : i32
    %c0_i32_0 = arith.constant 0 : i32
    %c0_i32_1 = arith.constant 0 : i32
    return %c0_i32, %c0_i32_0 : i32, i32
  }
  func.func @transform_2(%arg0: i32) -> (i32, i32) {
    %c0_i32 = arith.constant 0 : i32
    %c0_i32_0 = arith.constant 0 : i32
    return %arg0, %c0_i32 : i32, i32
  }
}

</mosaic_0001>

<llo_original>
// kernel: tpu_custom_call.1
$region0: #{tpu_custom_call.1}
  #allocation0 [shape = 'u32[]', space=smem, size = 0x4, offset = 0x4, fixed_abs, tag = 'smem constant byte address 0x4 - core index']
  #allocation1 [shape = 'u32[144,128]{1,0:T(1,128)}', space=vmem, size = 0x12000, scoped, tag = 'internal scratch']
  %s0 = inlined_call_operand.hbm [shape: f32[32,32], index: 0, kind: input, shape index: {}]
  %s1 = inlined_call_operand.hbm [shape: f32[32,32], index: 1, kind: input, shape index: {}]
  %s2 = inlined_call_operand.hbm [shape: f32[32,32], index: 2, kind: output, shape index: {}]
  %s3 = sld [smem:[#allocation0]]
  $region26: #{tpu_custom_call.1} parent=0
    _
  %s5 = ssub.s32 1, %s3
  %s6 = scalar_select 0, %s5, %s3
  $region1: #{tpu_custom_call.1} parent=0
    #allocation2 [shape = 'u8[16384]{0}', space=vmem, size = 0x4000, scoped, tag = 'input window, operand 0, single buffered']
    #allocation3 [shape = 's32[1]{0}', space=sflag, size = 0x4, scoped, tag = 'scoped memory for tpu_custom_call.1']
    #allocation4 [shape = 's32[1]{0}', space=sflag, size = 0x4, scoped, tag = 'scoped memory for tpu_custom_call.1']
    #allocation5 [shape = 'u8[16384]{0}', space=vmem, size = 0x4000, scoped, tag = 'input window, operand 1, single buffered']
    #allocation6 [shape = 's32[1]{0}', space=sflag, size = 0x4, scoped, tag = 'scoped memory for tpu_custom_call.1']
    #allocation7 [shape = 'u8[16384]{0}', space=vmem, size = 0x4000, scoped, tag = 'output window, operand 0, single buffered']
    %7 = vsyncpa [#allocation3], 0
    %8 = vsyncpa [#allocation6], 0
    %9 = vsyncpa [#allocation4], 0
    // Predicated region
    $region2: #{tpu_custom_call.1} parent=1 // pred_check
      _
    $region3: #{tpu_custom_call.1} parent=1 // pred_check_branch
      %11 = sbr.rel (0) target = $region5
    $region4: #{tpu_custom_call.1} parent=1 // pred_region
      %s13 = ssub.s32 512, 512
      %14 = vsyncadd [#allocation3], %s13
      %s15 = sshll.u32 [#allocation2], 4
      %s16 = int_to_ptr.vmem [resolvable:$true] %s15
      %21 = dma.hbm_to_vmem [thread:$0]  %s0, 512, %s16, [#allocation3], 128, 128, 8
    $region5: #{tpu_custom_call.1} parent=1 // pred_fallthru
      _
    // Predicated region
    $region6: #{tpu_custom_call.1} parent=1 // pred_check
      _
    $region7: #{tpu_custom_call.1} parent=1 // pred_check_branch
      %23 = sbr.rel (0) target = $region9
    $region8: #{tpu_custom_call.1} parent=1 // pred_region
      %s25 = ssub.s32 512, 512
      %26 = vsyncadd [#allocation6], %s25
      %s27 = sshll.u32 [#allocation5], 4
      %s28 = int_to_ptr.vmem [resolvable:$true] %s27
      %33 = dma.hbm_to_vmem [thread:$0]  %s1, 512, %s28, [#allocation6], 128, 128, 8
    $region9: #{tpu_custom_call.1} parent=1 // pred_fallthru
      _
    // Predicated region
    $region10: #{tpu_custom_call.1} parent=1 // pred_check
      _
    $region11: #{tpu_custom_call.1} parent=1 // pred_check_branch
      %35 = sbr.rel (0) target = $region13
    $region12: #{tpu_custom_call.1} parent=1 // pred_region
      %36 = dma.done [#allocation3], 512
    $region13: #{tpu_custom_call.1} parent=1 // pred_fallthru
      _
    // Predicated region
    $region14: #{tpu_custom_call.1} parent=1 // pred_check
      _
    $region15: #{tpu_custom_call.1} parent=1 // pred_check_branch
      %38 = sbr.rel (0) target = $region17
    $region16: #{tpu_custom_call.1} parent=1 // pred_region
      %39 = dma.done [#allocation6], 512
    $region17: #{tpu_custom_call.1} parent=1 // pred_fallthru
      _
    %v40 = vld [vmem:[#allocation2] sm:$0xff]
    %v41 = vld [vmem:[#allocation2 + $0x8] sm:$0xff]
    %v42 = vld [vmem:[#allocation2 + $0x10] sm:$0xff]
    %v43 = vld [vmem:[#allocation2 + $0x18] sm:$0xff]
    %v44 = vld [vmem:[#allocation5] sm:$0xff]
    %v45 = vld [vmem:[#allocation5 + $0x8] sm:$0xff]
    %v46 = vld [vmem:[#allocation5 + $0x10] sm:$0xff]
    %v47 = vld [vmem:[#allocation5 + $0x18] sm:$0xff]
    %vm48 = vcmask 261120
    %v50 = vsel %vm48, %v40, 0
    %v53 = vsel %vm48, %v41, 0
    %v56 = vsel %vm48, %v42, 0
    %v59 = vsel %vm48, %v43, 0
    %61 = vmatprep.subr.mxu0 0.0
    %62 = vmatpush1.msra.mxu0 0.0
    %63 = vmatprep.subr.mxu0 0.0
    %64 = vmatpush1.msra.mxu0 0.0
    %65 = vmatprep.subr.mxu0 0.0
    %66 = vmatpush1.msra.mxu0 0.0
    %67 = vmatprep.subr.mxu0 0.0
    %68 = vmatpush1.msra.mxu0 0.0
    %69 = vmatprep.subr.mxu0 0.0
    %70 = vmatpush1.msra.mxu0 0.0
    %71 = vmatprep.subr.mxu0 0.0
    %72 = vmatpush1.msra.mxu0 0.0
    %73 = vmatprep.subr.mxu0 0.0
    %74 = vmatpush1.msra.mxu0 0.0
    %75 = vmatprep.subr.mxu0 0.0
    %76 = vmatpush1.msra.mxu0 0.0
    %77 = vmatprep.subr.mxu0 0.0
    %78 = vmatpush1.msra.mxu0 0.0
    %79 = vmatprep.subr.mxu0 0.0
    %80 = vmatpush1.msra.mxu0 0.0
    %81 = vmatprep.subr.mxu0 0.0
    %82 = vmatpush1.msra.mxu0 0.0
    %83 = vmatprep.subr.mxu0 0.0
    %84 = vmatpush1.msra.mxu0 0.0
    %85 = vmatprep.subr.mxu0 0.0
    %86 = vmatpush1.msra.mxu0 %v47
    %87 = vmatprep.subr.mxu0 0.0
    %88 = vmatpush1.msra.mxu0 %v46
    %89 = vmatprep.subr.mxu0 0.0
    %90 = vmatpush1.msra.mxu0 %v45
    %91 = vmatprep.subr.mxu0 0.0
    %92 = vmatpush1.msra.mxu0 %v44
    %93 = vmatprep.subr.mxu0 0.0
    %94 = vmatpush2.msra.mxu0 0.0
    %95 = vmatprep.subr.mxu0 0.0
    %96 = vmatpush2.msra.mxu0 0.0
    %97 = vmatprep.subr.mxu0 0.0
    %98 = vmatpush2.msra.mxu0 0.0
    %99 = vmatprep.subr.mxu0 0.0
    %100 = vmatpush2.msra.mxu0 0.0
    %101 = vmatprep.subr.mxu0 0.0
    %102 = vmatpush2.msra.mxu0 0.0
    %103 = vmatprep.subr.mxu0 0.0
    %104 = vmatpush2.msra.mxu0 0.0
    %105 = vmatprep.subr.mxu0 0.0
    %106 = vmatpush2.msra.mxu0 0.0
    %107 = vmatprep.subr.mxu0 0.0
    %108 = vmatpush2.msra.mxu0 0.0
    %109 = vmatprep.subr.mxu0 0.0
    %110 = vmatpush2.msra.mxu0 0.0
    %111 = vmatprep.subr.mxu0 0.0
    %112 = vmatpush2.msra.mxu0 0.0
    %113 = vmatprep.subr.mxu0 0.0
    %114 = vmatpush2.msra.mxu0 0.0
    %115 = vmatprep.subr.mxu0 0.0
    %116 = vmatpush2.msra.mxu0 0.0
    %117 = vmatprep.subr.mxu0 0.0
    %118 = vmatpush2.msra.mxu0 0.0
    %119 = vmatprep.subr.mxu0 0.0
    %120 = vmatpush2.msra.mxu0 0.0
    %121 = vmatprep.subr.mxu0 0.0
    %122 = vmatpush2.msra.mxu0 0.0
    %123 = vmatprep.subr.mxu0 0.0
    %124 = vmatpush2.msra.mxu0 0.0
    %125 = vmatprep.mubr.f32.mxu0 0.0
    %126 = vmatmul.mubr.f32.gmra.mxu0 %v50
    %v127 = vpop.f32.mrf.mxu0
    %v128 = vadd.f32 0.0, %v127
    %v129 = vpop.f32.mrf.mxu0
    %130 = vmatprep.mubr.f32.mxu0 0.0
    %131 = vmatmul.mubr.f32.gmra.mxu0 %v53
    %v132 = vpop.f32.mrf.mxu0
    %v133 = vadd.f32 0.0, %v132
    %v134 = vpop.f32.mrf.mxu0
    %135 = vmatprep.mubr.f32.mxu0 0.0
    %136 = vmatmul.mubr.f32.gmra.mxu0 %v56
    %v137 = vpop.f32.mrf.mxu0
    %v138 = vadd.f32 0.0, %v137
    %v139 = vpop.f32.mrf.mxu0
    %140 = vmatprep.mubr.f32.mxu0 0.0
    %141 = vmatmul.mubr.f32.gmra.mxu0 %v59
    %v142 = vpop.f32.mrf.mxu0
    %v143 = vadd.f32 0.0, %v142
    %v144 = vpop.f32.mrf.mxu0
    %145 = vdwg.mxu0
    %146 = vst.msk [vmem:[#allocation7] sm:$0xff] %vm48, %v128
    %147 = vst.msk [vmem:[#allocation7 + $0x8] sm:$0xff] %vm48, %v133
    %148 = vst.msk [vmem:[#allocation7 + $0x10] sm:$0xff] %vm48, %v138
    %149 = vst.msk [vmem:[#allocation7 + $0x18] sm:$0xff] %vm48, %v143
    // Predicated region
    $region18: #{tpu_custom_call.1} parent=1 // pred_check
      _
    $region19: #{tpu_custom_call.1} parent=1 // pred_check_branch
      %151 = sbr.rel (0) target = $region21
    $region20: #{tpu_custom_call.1} parent=1 // pred_region
      %s153 = ssub.s32 512, 512
      %154 = vsyncadd [#allocation4], %s153
      %s155 = sshll.u32 [#allocation7], 4
      %s156 = int_to_ptr.vmem [resolvable:$true] %s155
      %161 = dma.vmem_to_hbm [thread:$0]  %s156, 512, %s2, [#allocation4], 128, 128, 8
    $region21: #{tpu_custom_call.1} parent=1 // pred_fallthru
      _
    // Predicated region
    $region22: #{tpu_custom_call.1} parent=1 // pred_check
      _
    $region23: #{tpu_custom_call.1} parent=1 // pred_check_branch
      %163 = sbr.rel (0) target = $region25
    $region24: #{tpu_custom_call.1} parent=1 // pred_region
      %164 = dma.done [#allocation4], 512
    $region25: #{tpu_custom_call.1} parent=1 // pred_fallthru
      _
    %165 = vsyncpa [#allocation3], 1
    %166 = vsyncpa [#allocation6], 1
    %167 = vsyncpa [#allocation4], 1

</llo_original>
